<compile_context>
chip_gen: v6e
topology: v6e:2x2x1
jax: 0.10.0
libtpu: 0.0.40
codegen_flags: <defaults>
</compile_context>

<pallas_src>
import jax
import jax.numpy as jnp
from jax.experimental import pallas as pl
from jax.experimental.pallas import tpu as pltpu


_MAX_TILE_BYTES = 8 * 1024 * 1024      # per in/out buffer (x2 each for double-buffering)
_VMEM_LIMIT_BYTES = 48 * 1024 * 1024   # raised scoped-VMEM limit; safe on v5e..v7x


def _two_mode_kernel(x_ref, o_ref):
    # Load in native dtype, compute in f32 (v5e EUP/VPU have no bf16 path and
    # bf16 squaring of (x - 1) loses too much precision), store in native dtype.
    x = x_ref[...].astype(jnp.float32)
    d = x - 1.0
    # -2 / (10*d)^2 == -0.02 / d^2 ; exact divide so d == 0 -> -inf -> exp -> 0.
    y = x * x + jnp.exp(-0.02 / (d * d)) - 2.0
    o_ref[...] = y.astype(o_ref.dtype)


def _two_mode_jnp(x):
    xf = x.astype(jnp.float32)
    return (xf ** 2 + jnp.exp(-2.0 / (10.0 * (xf - 1.0)) ** 2) - 2.0).astype(x.dtype)


def two_mode(x, *, donate=False):
    """Elementwise f(x) = x^2 + exp(-2/(10*(x-1))^2) - 2, arbitrary shape/dtype."""
    orig_shape = x.shape
    total = x.size
    if total == 0:
        return x

    # Pick a lane-dense last dim (multiple of 128 -> unmasked vld/vst).
    lanes = next((n for n in (512, 256, 128) if total % n == 0), None)
    if lanes is None:
        # TODO(synk): ragged totals could use an in-kernel masked final tile;
        # a single fused XLA elementwise pass is already at the HBM roofline,
        # so we fall back instead of re-introducing pad/slice HBM passes.
        return _two_mode_jnp(x)

    rows = total // lanes
    x2d = x.reshape(rows, lanes)                         # bitcast, no HBM pass

    itemsize = jnp.dtype(x.dtype).itemsize
    max_rows = max(8, _MAX_TILE_BYTES // (lanes * itemsize))
    if rows <= max_rows:
        tile_rows = rows                                 # single full-array block
    else:
        tile_rows = (max_rows // 8) * 8                  # sublane-aligned tile
    grid = (pl.cdiv(rows, tile_rows),)                   # partial last block is masked

    kwargs = {}
    if donate:
        # Free win (halves HBM footprint) when the caller can donate x.
        kwargs["input_output_aliases"] = {0: 0}

    out2d = pl.pallas_call(
        _two_mode_kernel,
        out_shape=jax.ShapeDtypeStruct((rows, lanes), x.dtype),
        grid=grid,
        in_specs=[pl.BlockSpec((tile_rows, lanes), lambda i: (i, 0))],
        out_specs=pl.BlockSpec((tile_rows, lanes), lambda i: (i, 0)),
        compiler_params=pltpu.CompilerParams(
            # "parallel": tiles may shard across both TensorCores on v7x; no-op
            # on v5e/v6e.  (Switch to pltpu.CORE_PARALLEL if a profile shows
            # only one TC picking up grid steps.)
            dimension_semantics=("parallel",),
            vmem_limit_bytes=_VMEM_LIMIT_BYTES,
        ),
        **kwargs,
    )(x2d)

    return out2d.reshape(orig_shape)                     # bitcast, no HBM pass


def _two_mode_ref(x):
    """Pure-JAX f32 reference mirroring the torch lambda exactly."""
    return x ** 2 + jnp.exp(-2.0 / (10.0 * (x - 1.0)) ** 2) - 2.0


if __name__ == "__main__":
    key = jax.random.PRNGKey(0)
    x = jax.random.normal(key, (2, 4, 16, 16), dtype=jnp.float32)

    out = jax.block_until_ready(two_mode(x))
    ref = _two_mode_ref(x)
    assert out.shape == x.shape and out.dtype == x.dtype
    assert jnp.allclose(out, ref, rtol=1e-5, atol=1e-5), "f32 mismatch vs reference"

    # Native-dtype path: bf16 load/store, f32 compute inside the kernel.
    xb = x.astype(jnp.bfloat16)
    outb = jax.block_until_ready(two_mode(xb))
    refb = _two_mode_ref(xb.astype(jnp.float32))
    assert outb.shape == xb.shape and outb.dtype == jnp.bfloat16
    assert jnp.allclose(outb.astype(jnp.float32), refb, rtol=2e-2, atol=2e-2), \
        "bf16 mismatch vs reference"

    print("KERNEL_OK")
</pallas_src>

<mosaic_0001>
module attributes {stable_mosaic.version = 11 : i64} {
  func.func @_two_mode_kernel(%arg0: i32, %arg1: memref<4x512xf32, #tpu.memory_space<vmem>>, %arg2: memref<4x512xf32, #tpu.memory_space<vmem>>) attributes {dimension_semantics = [#tpu.dimension_semantics<parallel>], iteration_bounds = array<i64: 1>, scalar_prefetch = 0 : i64, scratch_operands = 0 : i64, tpu.core_type = #tpu.core_type<tc>, window_params = [{transform_indices = @transform_0, window_bounds = array<i64: 4, 512>}, {transform_indices = @transform_1, window_bounds = array<i64: 4, 512>}]} {
    %c0 = arith.constant 0 : index
    %c0_0 = arith.constant 0 : index
    %0 = vector.load %arg1[%c0, %c0_0] : memref<4x512xf32, #tpu.memory_space<vmem>>, vector<4x512xf32>
    %cst = arith.constant 1.000000e+00 : f32
    %1 = vector.broadcast %cst : f32 to vector<4x512xf32>
    %2 = arith.subf %0, %1 : vector<4x512xf32>
    %3 = arith.mulf %0, %0 : vector<4x512xf32>
    %4 = arith.mulf %2, %2 : vector<4x512xf32>
    %cst_1 = arith.constant -2.000000e-02 : f32
    %5 = vector.broadcast %cst_1 : f32 to vector<4x512xf32>
    %6 = arith.divf %5, %4 : vector<4x512xf32>
    %7 = math.exp %6 : vector<4x512xf32>
    %8 = arith.addf %3, %7 : vector<4x512xf32>
    %cst_2 = arith.constant 2.000000e+00 : f32
    %9 = vector.broadcast %cst_2 : f32 to vector<4x512xf32>
    %10 = arith.subf %8, %9 : vector<4x512xf32>
    %c0_3 = arith.constant 0 : index
    %c0_4 = arith.constant 0 : index
    %11 = vector.load %arg2[%c0_3, %c0_4] : memref<4x512xf32, #tpu.memory_space<vmem>>, vector<4x512xf32>
    tpu.vector_store %arg2[%c0_3, %c0_4], %10 {strides = array<i32>} : memref<4x512xf32, #tpu.memory_space<vmem>>, vector<4x512xf32>,
    return
  }
  func.func @transform_0(%arg0: i32) -> (i32, i32) {
    %c0_i32 = arith.constant 0 : i32
    %c0_i32_0 = arith.constant 0 : i32
    return %arg0, %c0_i32 : i32, i32
  }
  func.func @transform_1(%arg0: i32) -> (i32, i32) {
    %c0_i32 = arith.constant 0 : i32
    %c0_i32_0 = arith.constant 0 : i32
    return %arg0, %c0_i32 : i32, i32
  }
}

</mosaic_0001>

<llo_original>
// kernel: tpu_custom_call.1
$region0: #{tpu_custom_call.1}
  #allocation0 [shape = 'u32[]', space=smem, size = 0x4, offset = 0x4, fixed_abs, tag = 'smem constant byte address 0x4 - core index']
  #allocation1 [shape = 'u32[144,128]{1,0:T(1,128)}', space=vmem, size = 0x12000, scoped, tag = 'internal scratch']
  %s0 = inlined_call_operand.hbm [shape: f32[4,512], index: 0, kind: input, shape index: {}]
  %s1 = inlined_call_operand.hbm [shape: f32[4,512], index: 1, kind: output, shape index: {}]
  %s2 = sld [smem:[#allocation0]]
  $region18: #{tpu_custom_call.1} parent=0
    _
  %s4 = ssub.s32 1, %s2
  %s5 = scalar_select 0, %s4, %s2
  $region1: #{tpu_custom_call.1} parent=0
    #allocation2 [shape = 'u8[8192]{0}', space=vmem, size = 0x2000, scoped, tag = 'input window, operand 0, single buffered']
    #allocation3 [shape = 's32[1]{0}', space=sflag, size = 0x4, scoped, tag = 'scoped memory for tpu_custom_call.1']
    #allocation4 [shape = 's32[1]{0}', space=sflag, size = 0x4, scoped, tag = 'scoped memory for tpu_custom_call.1']
    #allocation5 [shape = 'u8[8192]{0}', space=vmem, size = 0x2000, scoped, tag = 'output window, operand 0, single buffered']
    %6 = vsyncpa [#allocation3], 0
    %7 = vsyncpa [#allocation4], 0
    // Predicated region
    $region2: #{tpu_custom_call.1} parent=1 // pred_check
      _
    $region3: #{tpu_custom_call.1} parent=1 // pred_check_branch
      %9 = sbr.rel (0) target = $region5
    $region4: #{tpu_custom_call.1} parent=1 // pred_region
      %s11 = ssub.s32 256, 256
      %12 = vsyncadd [#allocation3], %s11
      %s14 = sshll.u32 [#allocation2], 4
      %s15 = int_to_ptr.vmem [resolvable:$true] %s14
      %17 = dma.hbm_to_vmem [thread:$0]  %s0, 256, %s15, [#allocation3]
    $region5: #{tpu_custom_call.1} parent=1 // pred_fallthru
      _
    // Predicated region
    $region6: #{tpu_custom_call.1} parent=1 // pred_check
      _
    $region7: #{tpu_custom_call.1} parent=1 // pred_check_branch
      %19 = sbr.rel (0) target = $region9
    $region8: #{tpu_custom_call.1} parent=1 // pred_region
      %20 = dma.done [#allocation3], 256
    $region9: #{tpu_custom_call.1} parent=1 // pred_fallthru
      _
    %v21 = vld [vmem:[#allocation2] sm:$0xff]
    %v22 = vld [vmem:[#allocation2 + $0x8] sm:$0xff]
    %v23 = vsub.f32 %v21, 1.0
    %v24 = vsub.f32 %v22, 1.0
    %v25 = vmul.f32 %v21, %v21
    %v26 = vmul.f32 %v22, %v22
    %v27 = vmul.f32 %v23, %v23
    %v28 = vmul.f32 %v24, %v24
    %v29 = vrcp.pop %v27
    %v30 = vmul.f32 -0.02, %v29
    %v31 = vrcp.pop %v28
    %v32 = vmul.f32 -0.02, %v31
    %v33 = vmul.f32 %v30, 1.442695
    %v34 = vpow.pop %v33
    %v35 = vmul.f32 %v32, 1.442695
    %v36 = vpow.pop %v35
    %v37 = vadd.f32 %v25, %v34
    %v38 = vadd.f32 %v26, %v36
    %v39 = vsub.f32 %v37, 2.0
    %v40 = vsub.f32 %v38, 2.0
    %41 = vst [vmem:[#allocation5] sm:$0xff] %v39
    %42 = vst [vmem:[#allocation5 + $0x8] sm:$0xff] %v40
    // Predicated region
    $region10: #{tpu_custom_call.1} parent=1 // pred_check
      _
    $region11: #{tpu_custom_call.1} parent=1 // pred_check_branch
      %44 = sbr.rel (0) target = $region13
    $region12: #{tpu_custom_call.1} parent=1 // pred_region
      %s46 = ssub.s32 256, 256
      %47 = vsyncadd [#allocation4], %s46
      %s49 = sshll.u32 [#allocation5], 4
      %s50 = int_to_ptr.vmem [resolvable:$true] %s49
      %52 = dma.vmem_to_hbm [thread:$0]  %s50, 256, %s1, [#allocation4]
    $region13: #{tpu_custom_call.1} parent=1 // pred_fallthru
      _
    // Predicated region
    $region14: #{tpu_custom_call.1} parent=1 // pred_check
      _
    $region15: #{tpu_custom_call.1} parent=1 // pred_check_branch
      %54 = sbr.rel (0) target = $region17
    $region16: #{tpu_custom_call.1} parent=1 // pred_region
      %55 = dma.done [#allocation4], 256
    $region17: #{tpu_custom_call.1} parent=1 // pred_fallthru
      _
    %56 = vsyncpa [#allocation3], 1
    %57 = vsyncpa [#allocation4], 1

</llo_original>
